<compile_context>
chip_gen: v7x
topology: tpu7x:2x2x1
jax: 0.10.0
libtpu: 0.0.40
codegen_flags: <defaults>
</compile_context>

<pallas_src>
import jax
import jax.numpy as jnp
from jax.experimental import pallas as pl
from jax.experimental.pallas import tpu as pltpu


def _cdiv(a, b):
    return -(-a // b)


def _round_up(a, b):
    return _cdiv(a, b) * b


def _device_params():
    """(num_tensorcores, target_input_block_bytes, vmem_limit_bytes) per generation."""
    kind = ""
    try:
        dev = jax.devices()[0]
        if dev.platform == "tpu":
            kind = dev.device_kind.lower()
    except Exception:  # no device info (e.g. interpret mode) -> safe defaults
        pass
    if "v7" in kind or "7x" in kind:
        return 2, 12 << 20, 48 << 20   # 2 TC/chip, 64 MiB VMEM per TC, ~3.2 TB/s
    if "v6" in kind:
        return 1, 10 << 20, 64 << 20
    if "v5p" in kind or "v4" in kind:
        return 2, 8 << 20, 64 << 20
    if "v5" in kind:                    # v5e / v5 lite
        return 1, 8 << 20, 64 << 20
    return 1, 8 << 20, 48 << 20         # unknown: conservative, safe everywhere


def _pick_hidden_tile(H, num_cores, hidden_tile):
    if hidden_tile is not None:
        th = int(hidden_tile)
        assert th == H or (th % 128 == 0 and H % th == 0), (
            "hidden_tile must equal hidden_size or be a 128-multiple dividing it")
        return th
    # Split the lane axis only on multi-TensorCore parts so each core gets an
    # independent "parallel" block; on single-TC chips keep reads contiguous.
    if num_cores >= 2 and H % 128 == 0 and H >= 128 * num_cores:
        t = (H // num_cores) // 128 * 128
        while t >= 128:
            if H % t == 0:
                return t
            t -= 128
    return H


def _pick_batch_tile(B, th, itemsize, align, num_cores, n_h,
                     in_budget, out_budget, batch_tile):
    if batch_tile is not None:
        return min(int(batch_tile), B)
    row_bytes = th * itemsize
    cap = max(1, min(out_budget // row_bytes, in_budget // (align * row_bytes)))
    if num_cores >= 2 and n_h < num_cores and B >= num_cores:
        cap = min(cap, _cdiv(B, num_cores))     # second core gets a batch block
    if cap >= B:
        return B
    cap = max(align, cap // align * align)      # output 2nd-minor alignment
    if cap >= B:
        return B
    lo = max(align, (cap // 2) // align * align)
    for tb in range(cap, lo - 1, -align):       # prefer an aligned divisor of B
        if B % tb == 0:
            return tb
    return cap                                   # partial last batch block is masked by Pallas


def _pick_seq_tile(S, row_bytes, align, in_budget, seq_tile):
    if seq_tile is not None:
        ts = min(int(seq_tile), S)
        assert ts == S or ts % align == 0, (
            "seq_tile must equal the seq length or be a multiple of the sublane alignment")
        return ts
    max_rows = max(align, in_budget // max(1, row_bytes))
    if max_rows >= S:
        return S
    # Balanced tiling: fewest seq steps with tiles <= max_rows, then align.
    n_steps = _cdiv(S, max_rows)
    ts = _round_up(_cdiv(S, n_steps), align)
    if ts > max_rows >= align:
        ts = max_rows // align * align
    ts = min(ts, S)
    if S % ts:
        # Prefer an aligned divisor of S near the target: removes the remainder
        # tile (and its extra in-kernel branch) entirely.
        lo = max(align, (ts * 3 // 4) // align * align)
        for cand in range(ts // align * align, lo - 1, -align):
            if cand > 0 and S % cand == 0:
                return cand
    return ts


def _make_max_pool_kernel(rem):
    """Max over seq axis of (tb, ts, th) blocks into a resident (tb, th) output."""

    def kernel(x_ref, o_ref):
        s = pl.program_id(2)

        def update(tile_max):
            @pl.when(s == 0)
            def _():
                o_ref[...] = tile_max            # first step: write directly

            @pl.when(s > 0)
            def _():
                o_ref[...] = jnp.maximum(o_ref[...], tile_max)

        if rem == 0:
            update(jnp.max(x_ref[...], axis=1))
        else:
            last = pl.num_programs(2) - 1

            @pl.when(s < last)
            def _():
                update(jnp.max(x_ref[...], axis=1))

            @pl.when(s == last)
            def _():
                # Static remainder: reduce only the valid rows of the partial
                # tile; no iota/compare/select mask on the full tiles.
                update(jnp.max(x_ref[:, :rem, :], axis=1))

    return kernel


def max_pooler(hidden_states: jax.Array, hidden_size: int, *,
               seq_tile: int | None = None,
               hidden_tile: int | None = None,
               batch_tile: int | None = None,
               min_pallas_bytes: int = 2 << 20):
    """Equivalent of MaxPooler.forward: max over the seq axis -> (-1, hidden)."""
    assert hidden_states.shape[-1] == hidden_size
    S = hidden_states.shape[-2]
    x = hidden_states.reshape(-1, S, hidden_size)   # (B, S, H)
    B, _, H = x.shape
    itemsize = jnp.dtype(x.dtype).itemsize

    # Tiny inputs: pallas_call launch / per-step overhead dominates; XLA's own
    # reduce is already at the HBM roofline there.
    if B * S * H * itemsize < min_pallas_bytes:
        return jnp.max(x, axis=1)

    num_cores, target_block_bytes, vmem_limit = _device_params()
    align = max(8, 32 // itemsize)          # sublane alignment: 8 f32, 16 bf16, 32 int8
    out_budget = 2 << 20                    # resident output block budget
    in_budget = min(target_block_bytes,
                    (vmem_limit - 2 * out_budget - (2 << 20)) // 2)

    th = _pick_hidden_tile(H, num_cores, hidden_tile)
    n_h = H // th
    tb = _pick_batch_tile(B, th, itemsize, align, num_cores, n_h,
                          in_budget, out_budget, batch_tile)
    ts = _pick_seq_tile(S, tb * th * itemsize, align, in_budget, seq_tile)

    n_b = pl.cdiv(B, tb)
    n_s = pl.cdiv(S, ts)
    rem = S % ts

    kernel = _make_max_pool_kernel(rem)

    cost = pl.CostEstimate(
        flops=B * S * H,
        transcendentals=0,
        bytes_accessed=B * S * H * itemsize + B * H * itemsize,
    )

    return pl.pallas_call(
        kernel,
        out_shape=jax.ShapeDtypeStruct((B, H), x.dtype),
        grid_spec=pltpu.PrefetchScalarGridSpec(
            num_scalar_prefetch=0,
            grid=(n_b, n_h, n_s),           # reduction (seq) axis last
            in_specs=[pl.BlockSpec((tb, ts, th), lambda b, h, s: (b, s, h))],
            out_specs=pl.BlockSpec((tb, th), lambda b, h, s: (b, h)),
        ),
        compiler_params=pltpu.CompilerParams(
            dimension_semantics=("parallel", "parallel", "arbitrary"),
            vmem_limit_bytes=int(vmem_limit),
        ),
        cost_estimate=cost,
    )(x)


if __name__ == "__main__":
    key = jax.random.PRNGKey(0)
    k1, k2, k3 = jax.random.split(key, 3)

    # 1) Shapes implied by the module: batch=2, seq=8, hidden=32 (force the Pallas path).
    b, s, h = 2, 8, 32
    x1 = jax.random.normal(k1, (b, s, h), dtype=jnp.float32)
    out1 = jax.block_until_ready(max_pooler(x1, h, min_pallas_bytes=0))
    ref1 = jnp.max(x1, axis=-2).reshape(-1, h)
    assert out1.shape == (b, h), out1.shape
    assert jnp.array_equal(out1, ref1), "mismatch vs reference (case 1)"

    # 2) Non-divisible seq length: multi-step seq grid + static-remainder last tile.
    b, s, h = 2, 24, 32
    x2 = jax.random.normal(k2, (b, s, h), dtype=jnp.float32)
    out2 = jax.block_until_ready(max_pooler(x2, h, seq_tile=16, min_pallas_bytes=0))
    ref2 = jnp.max(x2, axis=-2).reshape(-1, h)
    assert jnp.array_equal(out2, ref2), "mismatch vs reference (case 2)"

    # 3) bf16, lane-aligned hidden, extra leading dim, partial last seq tile.
    b, s, h = 2, 40, 256
    x3 = jax.random.normal(k3, (1, b, s, h), dtype=jnp.bfloat16)
    out3 = jax.block_until_ready(max_pooler(x3, h, seq_tile=16, min_pallas_bytes=0))
    ref3 = jnp.max(x3.reshape(-1, s, h), axis=-2)
    assert out3.shape == (b, h), out3.shape
    assert jnp.array_equal(out3, ref3), "mismatch vs reference (case 3)"

    # 4) Fully automatic tiling path (no user tiles), rem == 0 single seq step.
    b, s, h = 4, 64, 128
    x4 = jax.random.normal(k1, (b, s, h), dtype=jnp.float32)
    out4 = jax.block_until_ready(max_pooler(x4, h, min_pallas_bytes=0))
    ref4 = jnp.max(x4, axis=-2)
    assert jnp.array_equal(out4, ref4), "mismatch vs reference (case 4)"

    print("KERNEL_OK")
</pallas_src>

<mosaic_0001>
module attributes {stable_mosaic.version = 11 : i64} {
  func.func @kernel(%arg0: i32, %arg1: i32, %arg2: i32, %arg3: memref<2x8x32xf32, #tpu.memory_space<vmem>>, %arg4: memref<2x32xf32, #tpu.memory_space<vmem>>) attributes {dimension_semantics = [#tpu.dimension_semantics<parallel>, #tpu.dimension_semantics<parallel>, #tpu.dimension_semantics<arbitrary>], iteration_bounds = array<i64: 1, 1, 1>, scalar_prefetch = 0 : i64, scratch_operands = 0 : i64, tpu.core_type = #tpu.core_type<tc>, window_params = [{transform_indices = @transform_0, window_bounds = array<i64: 2, 8, 32>}, {transform_indices = @transform_1, window_bounds = array<i64: 2, 32>}]} {
    %c0 = arith.constant 0 : index
    %c0_0 = arith.constant 0 : index
    %c0_1 = arith.constant 0 : index
    %0 = vector.load %arg3[%c0, %c0_0, %c0_1] : memref<2x8x32xf32, #tpu.memory_space<vmem>>, vector<2x8x32xf32>
    %cst = arith.constant dense<0xFF800000> : vector<2x32xf32>
    %1 = vector.multi_reduction <maximumf>, %0, %cst [1] : vector<2x8x32xf32> to vector<2x32xf32>
    %c0_i32 = arith.constant 0 : i32
    %2 = arith.cmpi eq, %arg2, %c0_i32 : i32
    %3 = arith.extui %2 : i1 to i32
    %c0_i32_2 = arith.constant 0 : i32
    %4 = arith.cmpi ne, %3, %c0_i32_2 : i32
    scf.if %4 {
      %c0_5 = arith.constant 0 : index
      %c0_6 = arith.constant 0 : index
      %8 = vector.load %arg4[%c0_5, %c0_6] : memref<2x32xf32, #tpu.memory_space<vmem>>, vector<2x32xf32>
      tpu.vector_store %arg4[%c0_5, %c0_6], %1 {strides = array<i32>} : memref<2x32xf32, #tpu.memory_space<vmem>>, vector<2x32xf32>,
    } else {
    }
    %c0_i32_3 = arith.constant 0 : i32
    %5 = arith.cmpi sgt, %arg2, %c0_i32_3 : i32
    %6 = arith.extui %5 : i1 to i32
    %c0_i32_4 = arith.constant 0 : i32
    %7 = arith.cmpi ne, %6, %c0_i32_4 : i32
    scf.if %7 {
      %c0_5 = arith.constant 0 : index
      %c0_6 = arith.constant 0 : index
      %8 = vector.load %arg4[%c0_5, %c0_6] : memref<2x32xf32, #tpu.memory_space<vmem>>, vector<2x32xf32>
      %9 = arith.maximumf %8, %1 : vector<2x32xf32>
      %c0_7 = arith.constant 0 : index
      %c0_8 = arith.constant 0 : index
      %10 = vector.load %arg4[%c0_7, %c0_8] : memref<2x32xf32, #tpu.memory_space<vmem>>, vector<2x32xf32>
      tpu.vector_store %arg4[%c0_7, %c0_8], %9 {strides = array<i32>} : memref<2x32xf32, #tpu.memory_space<vmem>>, vector<2x32xf32>,
    } else {
    }
    return
  }
  func.func @transform_0(%arg0: i32, %arg1: i32, %arg2: i32) -> (i32, i32, i32) {
    %c0_i32 = arith.constant 0 : i32
    return %arg0, %arg2, %arg1 : i32, i32, i32
  }
  func.func @transform_1(%arg0: i32, %arg1: i32, %arg2: i32) -> (i32, i32) {
    %c0_i32 = arith.constant 0 : i32
    return %arg0, %arg1 : i32, i32
  }
}

</mosaic_0001>

<llo_original>
// kernel: tpu_custom_call.1
$region0: #{tpu_custom_call.1}
  #allocation0 [shape = 'u32[]', space=smem, size = 0x4, offset = 0x4, fixed_abs, tag = 'smem constant byte address 0x4 - core index']
  #allocation1 [shape = 'u32[144,128]{1,0:T(1,128)}', space=vmem, size = 0x12000, scoped, tag = 'internal scratch']
  %s0 = inlined_call_operand.hbm [shape: f32[2,8,32], index: 0, kind: input, shape index: {}]
  %s1 = inlined_call_operand.hbm [shape: f32[2,32], index: 1, kind: output, shape index: {}]
  %s2 = sld [smem:[#allocation0]]
  $region26: #{tpu_custom_call.1} parent=0
    _
  %s4 = ssub.s32 1, %s2
  %s5 = scalar_select 0, %s4, %s2
  $region1: #{tpu_custom_call.1} parent=0
    #allocation2 [shape = 'u8[8192]{0}', space=vmem, size = 0x2000, scoped, tag = 'input window, operand 0, single buffered']
    #allocation3 [shape = 's32[1]{0}', space=sflag, size = 0x4, scoped, tag = 'scoped memory for tpu_custom_call.1']
    #allocation4 [shape = 's32[1]{0}', space=sflag, size = 0x4, scoped, tag = 'scoped memory for tpu_custom_call.1']
    #allocation5 [shape = 'u8[1024]{0}', space=vmem, size = 0x400, scoped, tag = 'output window, operand 0, single buffered']
    %6 = vsyncpa [#allocation3], 0
    %7 = vsyncpa [#allocation4], 0
    // Predicated region
    $region2: #{tpu_custom_call.1} parent=1 // pred_check
      _
    $region3: #{tpu_custom_call.1} parent=1 // pred_check_branch
      %9 = sbr.rel (0) target = $region5
    $region4: #{tpu_custom_call.1} parent=1 // pred_region
      %s11 = ssub.s32 256, 256
      %12 = vsyncadd [#allocation3], %s11
      %s13 = sshll.u32 [#allocation2], 4
      %s14 = int_to_ptr.vmem [resolvable:$true] %s13
      %19 = dma.hbm_to_vmem [thread:$0]  %s0, 256, %s14, [#allocation3], 128, 128, 8
    $region5: #{tpu_custom_call.1} parent=1 // pred_fallthru
      _
    // Predicated region
    $region6: #{tpu_custom_call.1} parent=1 // pred_check
      _
    $region7: #{tpu_custom_call.1} parent=1 // pred_check_branch
      %21 = sbr.rel (0) target = $region9
    $region8: #{tpu_custom_call.1} parent=1 // pred_region
      %22 = dma.done [#allocation3], 256
    $region9: #{tpu_custom_call.1} parent=1 // pred_fallthru
      _
    %v23 = vld [vmem:[#allocation2] sm:$0xff]
    %v24 = vld [vmem:[#allocation2 + $0x8] sm:$0xff]
    %vm25 = vcmask 261120
    %v26 = vsel %vm25, %v23, -inf
    %v27 = vrot.slane %v26, 4
    %v28 = vmax.f32 %v26, %v27
    %v29 = vrot.slane %v28, 2
    %v30 = vmax.f32 %v28, %v29
    %v31 = vrot.slane %v30, 1
    %v32 = vmax.f32 %v30, %v31
    %v33 = vsel %vm25, %v24, -inf
    %v34 = vrot.slane %v33, 4
    %v35 = vmax.f32 %v33, %v34
    %v36 = vrot.slane %v35, 2
    %v37 = vmax.f32 %v35, %v36
    %v38 = vrot.slane %v37, 1
    %v39 = vmax.f32 %v37, %v38
    %p40 = scmp.eq.s32.totalorder 0, 0
    // Predicated region
    $region10: #{tpu_custom_call.1} parent=1 // pred_check
      %p41 = pneg %p40
    $region11: #{tpu_custom_call.1} parent=1 // pred_check_branch
      %43 = sbr.rel (%p41) target = $region13
    $region12: #{tpu_custom_call.1} parent=1 // pred_region
      %vm46 = vcmask 1041409
      %v47 = vsel %vm46, %v39, %v32
      %vm49 = vcmask 254976
      %50 = vst.msk [vmem:[#allocation5] sm:$0x3] %vm49, %v47
    $region13: #{tpu_custom_call.1} parent=1 // pred_fallthru
      _
    %p51 = scmp.gt.s32.totalorder 0, 0
    // Predicated region
    $region14: #{tpu_custom_call.1} parent=1 // pred_check
      %p52 = pneg %p51
    $region15: #{tpu_custom_call.1} parent=1 // pred_check_branch
      %54 = sbr.rel (%p52) target = $region17
    $region16: #{tpu_custom_call.1} parent=1 // pred_region
      %v55 = vld [vmem:[#allocation5] sm:$0x3]
      %vm58 = vcmask 1041409
      %v59 = vsel %vm58, %v39, %v32
      %v61 = vmax.f32 %v55, %v59
      %vm62 = vcmask 254976
      %63 = vst.msk [vmem:[#allocation5] sm:$0x3] %vm62, %v61
    $region17: #{tpu_custom_call.1} parent=1 // pred_fallthru
      _
    // Predicated region
    $region18: #{tpu_custom_call.1} parent=1 // pred_check
      _
    $region19: #{tpu_custom_call.1} parent=1 // pred_check_branch
      %65 = sbr.rel (0) target = $region21
    $region20: #{tpu_custom_call.1} parent=1 // pred_region
      %s67 = ssub.s32 32, 32
      %68 = vsyncadd [#allocation4], %s67
      %s70 = sshll.u32 [#allocation5], 4
      %s71 = int_to_ptr.vmem [resolvable:$true] %s70
      %73 = dma.vmem_to_hbm [thread:$0]  %s71, 32, %s1, [#allocation4]
    $region21: #{tpu_custom_call.1} parent=1 // pred_fallthru
      _
    // Predicated region
    $region22: #{tpu_custom_call.1} parent=1 // pred_check
      _
    $region23: #{tpu_custom_call.1} parent=1 // pred_check_branch
      %75 = sbr.rel (0) target = $region25
    $region24: #{tpu_custom_call.1} parent=1 // pred_region
      %76 = dma.done [#allocation4], 32
    $region25: #{tpu_custom_call.1} parent=1 // pred_fallthru
      _
    %77 = vsyncpa [#allocation3], 1
    %78 = vsyncpa [#allocation4], 1

</llo_original>
